<compile_context>
chip_gen: v5e
topology: v5e:2x2
jax: 0.10.0
libtpu: 0.0.40
codegen_flags: <defaults>
</compile_context>

<pallas_src>
import functools

import jax
import jax.numpy as jnp
from jax.experimental import pallas as pl
from jax.experimental.pallas import tpu as pltpu


def _round_up(v, m):
    return (v + m - 1) // m * m


def dueling_dqn_kernel(x_ref, w1_ref, b1_ref, wh_ref, bh_ref, w2_ref, b2_ref,
                       out_ref, *, valid_b, valid_a):
    """One block: whole (padded) batch, all weights VMEM-resident.

    Shapes (lane dims padded to multiples of 128, batch padded to mult. of 8):
      x_ref   (Bp, Dp)    padded input, zeros outside [:B, :INPUT_DIM]
      w1_ref  (Dp, Hp)    feature weight, valid block [:INPUT_DIM, :H]
      b1_ref  (1,  Hp)
      wh_ref  (Hp, HHp)   fused head-hidden weight: cols [:H]=Wa1, cols [H:2H]=Wv1
      bh_ref  (1,  HHp)   fused bias: [ba1 | bv1 | 0]
      w2_ref  (HHp, Ap)   fused output weight: [:H, :A]=Wa2, [H:2H, A]=Wv2
      b2_ref  (1,  Ap)    fused bias: [:A]=ba2, [A]=bv2
      out_ref (Bp, Ap)    padded Q-values; wrapper slices back to (B, A)
    """
    x = x_ref[...]

    # --- feature: ReLU(x @ W1 + b1) ------------------------------------ MXU #1
    h = jnp.dot(x, w1_ref[...], preferred_element_type=jnp.float32) + b1_ref[...]
    h = jnp.maximum(h, 0.0)

    # --- fused head hiddens: [ha | hv] = ReLU(h @ [Wa1|Wv1] + [ba1|bv1]) -- MXU #2
    hh = jnp.dot(h, wh_ref[...], preferred_element_type=jnp.float32) + bh_ref[...]
    hh = jnp.maximum(hh, 0.0)

    # --- fused outputs: cols [:A] = adv, col A = val, rest = 0 ----------- MXU #3
    # (Wa2 rows [H:] and Wv2 rows [:H] are zero, so the two halves of hh stay
    #  cleanly separated inside the single matmul.)
    out2 = jnp.dot(hh, w2_ref[...], preferred_element_type=jnp.float32) + b2_ref[...]

    rows = jax.lax.broadcasted_iota(jnp.int32, out2.shape, 0)
    cols = jax.lax.broadcasted_iota(jnp.int32, out2.shape, 1)

    # global scalar mean of advantage over the VALID (B, A) region only
    adv_valid = (rows < valid_b) & (cols < valid_a)
    adv_sum = jnp.sum(jnp.where(adv_valid, out2, 0.0), keepdims=True)     # (1, 1)
    adv_mean = adv_sum * (1.0 / float(valid_b * valid_a))                 # VPU scale

    # value: pull lane `valid_a` out of the fused output and keep as (Bp, 1)
    val = jnp.sum(jnp.where(cols == valid_a, out2, 0.0), axis=-1, keepdims=True)

    # dueling combine; lane-dense unmasked store (junk in padded cols is sliced
    # off by the wrapper)
    out_ref[...] = out2 + val - adv_mean


def init_params(key, input_dim, hidden, num_actions):
    """Deterministic synthetic parameters (shapes match the PyTorch module,
    stored as (in_features, out_features) i.e. nn.Linear weight transposed)."""
    ks = jax.random.split(key, 10)

    def linear(kw, kb, fan_in, fan_out):
        w = jax.random.normal(kw, (fan_in, fan_out), jnp.float32) * (1.0 / jnp.sqrt(fan_in))
        b = jax.random.normal(kb, (1, fan_out), jnp.float32) * 0.01
        return w, b

    w1, b1 = linear(ks[0], ks[1], input_dim, hidden)
    wa1, ba1 = linear(ks[2], ks[3], hidden, hidden)
    wa2, ba2 = linear(ks[4], ks[5], hidden, num_actions)
    wv1, bv1 = linear(ks[6], ks[7], hidden, hidden)
    wv2, bv2 = linear(ks[8], ks[9], hidden, 1)
    return dict(w1=w1, b1=b1, wa1=wa1, ba1=ba1, wa2=wa2, ba2=ba2,
                wv1=wv1, bv1=bv1, wv2=wv2, bv2=bv2)


def prepare_padded_params(p, input_dim, hidden, num_actions, lane=128):
    """One-time weight packing/padding to TPU-native (8,128)-aligned tiles."""
    H, A = hidden, num_actions
    Dp = _round_up(input_dim, lane)          # padded input feature lanes
    Hp = _round_up(H, lane)                  # padded feature-hidden lanes
    HHp = _round_up(2 * H, lane)             # padded fused-head-hidden lanes
    Ap = _round_up(A + 1, lane)              # action lanes + 1 spare lane for val

    w1 = jnp.zeros((Dp, Hp), jnp.float32).at[:input_dim, :H].set(p["w1"])
    b1 = jnp.zeros((1, Hp), jnp.float32).at[:, :H].set(p["b1"])

    # fused [Wa1 | Wv1] and [ba1 | bv1]
    wh = (jnp.zeros((Hp, HHp), jnp.float32)
          .at[:H, :H].set(p["wa1"])
          .at[:H, H:2 * H].set(p["wv1"]))
    bh = (jnp.zeros((1, HHp), jnp.float32)
          .at[:, :H].set(p["ba1"])
          .at[:, H:2 * H].set(p["bv1"]))

    # fused output weight: adv in cols [:A] (fed by ha rows), val in col A
    # (fed by hv rows)
    w2 = (jnp.zeros((HHp, Ap), jnp.float32)
          .at[:H, :A].set(p["wa2"])
          .at[H:2 * H, A].set(p["wv2"].reshape(H)))
    b2 = (jnp.zeros((1, Ap), jnp.float32)
          .at[:, :A].set(p["ba2"])
          .at[:, A].set(p["bv2"].reshape(())))

    dims = dict(Dp=Dp, Hp=Hp, HHp=HHp, Ap=Ap, A=A)
    padded = dict(w1=w1, b1=b1, wh=wh, bh=bh, w2=w2, b2=b2)
    return padded, dims


def dueling_dqn_forward(x, padded, dims):
    B, din = x.shape
    Bp = _round_up(max(B, 8), 8)                 # sublane-aligned batch
    Dp, Ap, A = dims["Dp"], dims["Ap"], dims["A"]

    # per-call input padding (cheap XLA op); weights are pre-padded once
    x_pad = jnp.zeros((Bp, Dp), jnp.float32).at[:B, :din].set(x)

    vmem = pl.BlockSpec(memory_space=pltpu.MemorySpace.VMEM)
    kernel = functools.partial(dueling_dqn_kernel, valid_b=B, valid_a=A)
    args = (x_pad,
            padded["w1"], padded["b1"],
            padded["wh"], padded["bh"],
            padded["w2"], padded["b2"])

    out = pl.pallas_call(
        kernel,
        out_shape=jax.ShapeDtypeStruct((Bp, Ap), jnp.float32),
        in_specs=[vmem] * len(args),
        out_specs=vmem,
    )(*args)
    return out[:B, :A]


def reference_forward(x, p):
    """Pure-JAX reference mirroring the PyTorch forward exactly."""
    h = jax.nn.relu(x @ p["w1"] + p["b1"])
    adv = jax.nn.relu(h @ p["wa1"] + p["ba1"]) @ p["wa2"] + p["ba2"]
    val = jax.nn.relu(h @ p["wv1"] + p["bv1"]) @ p["wv2"] + p["bv2"]
    return val + adv - jnp.mean(adv)


if __name__ == "__main__":
    INPUT_DIM, HIDDEN_SIZE, NUM_ACTIONS = 16, 32, 8
    BATCH = 2

    key = jax.random.PRNGKey(0)
    k_x, k_p = jax.random.split(key)
    x = jax.random.normal(k_x, (BATCH, INPUT_DIM), jnp.float32)
    params = init_params(k_p, INPUT_DIM, HIDDEN_SIZE, NUM_ACTIONS)
    padded, dims = prepare_padded_params(params, INPUT_DIM, HIDDEN_SIZE, NUM_ACTIONS)

    q = dueling_dqn_forward(x, padded, dims)
    q = jax.block_until_ready(q)

    q_ref = reference_forward(x, params)
    assert q.shape == (BATCH, NUM_ACTIONS)
    assert jnp.allclose(q, q_ref, atol=1e-5, rtol=1e-5), (q, q_ref)

    print("KERNEL_OK")
</pallas_src>

<mosaic_0001>
module attributes {stable_mosaic.version = 11 : i64} {
  func.func @dueling_dqn_kernel(%arg0: memref<8x128xf32, #tpu.memory_space<vmem>>, %arg1: memref<128x128xf32, #tpu.memory_space<vmem>>, %arg2: memref<1x128xf32, #tpu.memory_space<vmem>>, %arg3: memref<128x128xf32, #tpu.memory_space<vmem>>, %arg4: memref<1x128xf32, #tpu.memory_space<vmem>>, %arg5: memref<128x128xf32, #tpu.memory_space<vmem>>, %arg6: memref<1x128xf32, #tpu.memory_space<vmem>>, %arg7: memref<8x128xf32, #tpu.memory_space<vmem>>) attributes {dimension_semantics = [], scalar_prefetch = 0 : i64, scratch_operands = 0 : i64, tpu.core_type = #tpu.core_type<tc>} {
    %c0 = arith.constant 0 : index
    %c0_0 = arith.constant 0 : index
    %0 = vector.load %arg0[%c0, %c0_0] : memref<8x128xf32, #tpu.memory_space<vmem>>, vector<8x128xf32>
    %c0_1 = arith.constant 0 : index
    %c0_2 = arith.constant 0 : index
    %1 = vector.load %arg1[%c0_1, %c0_2] : memref<128x128xf32, #tpu.memory_space<vmem>>, vector<128x128xf32>
    %cst = arith.constant dense<0.000000e+00> : vector<8x128xf32>
    %2 = tpu.matmul %0, %1, %cst {dimension_numbers = #tpu.dot_dimension_numbers<[1], [0], [0], [1], [0, 0, 1, 1], [], []>} : vector<8x128xf32>, vector<128x128xf32>, vector<8x128xf32> -> vector<8x128xf32>
    %c0_3 = arith.constant 0 : index
    %c0_4 = arith.constant 0 : index
    %3 = vector.load %arg2[%c0_3, %c0_4] : memref<1x128xf32, #tpu.memory_space<vmem>>, vector<1x128xf32>
    %4 = vector.broadcast %3 : vector<1x128xf32> to vector<8x128xf32>
    %5 = arith.addf %2, %4 : vector<8x128xf32>
    %cst_5 = arith.constant 0.000000e+00 : f32
    %6 = vector.broadcast %cst_5 : f32 to vector<8x128xf32>
    %7 = arith.maximumf %5, %6 : vector<8x128xf32>
    %c0_6 = arith.constant 0 : index
    %c0_7 = arith.constant 0 : index
    %8 = vector.load %arg3[%c0_6, %c0_7] : memref<128x128xf32, #tpu.memory_space<vmem>>, vector<128x128xf32>
    %cst_8 = arith.constant dense<0.000000e+00> : vector<8x128xf32>
    %9 = tpu.matmul %7, %8, %cst_8 {dimension_numbers = #tpu.dot_dimension_numbers<[1], [0], [0], [1], [0, 0, 1, 1], [], []>} : vector<8x128xf32>, vector<128x128xf32>, vector<8x128xf32> -> vector<8x128xf32>
    %c0_9 = arith.constant 0 : index
    %c0_10 = arith.constant 0 : index
    %10 = vector.load %arg4[%c0_9, %c0_10] : memref<1x128xf32, #tpu.memory_space<vmem>>, vector<1x128xf32>
    %11 = vector.broadcast %10 : vector<1x128xf32> to vector<8x128xf32>
    %12 = arith.addf %9, %11 : vector<8x128xf32>
    %cst_11 = arith.constant 0.000000e+00 : f32
    %13 = vector.broadcast %cst_11 : f32 to vector<8x128xf32>
    %14 = arith.maximumf %12, %13 : vector<8x128xf32>
    %c0_12 = arith.constant 0 : index
    %c0_13 = arith.constant 0 : index
    %15 = vector.load %arg5[%c0_12, %c0_13] : memref<128x128xf32, #tpu.memory_space<vmem>>, vector<128x128xf32>
    %cst_14 = arith.constant dense<0.000000e+00> : vector<8x128xf32>
    %16 = tpu.matmul %14, %15, %cst_14 {dimension_numbers = #tpu.dot_dimension_numbers<[1], [0], [0], [1], [0, 0, 1, 1], [], []>} : vector<8x128xf32>, vector<128x128xf32>, vector<8x128xf32> -> vector<8x128xf32>
    %c0_15 = arith.constant 0 : index
    %c0_16 = arith.constant 0 : index
    %17 = vector.load %arg6[%c0_15, %c0_16] : memref<1x128xf32, #tpu.memory_space<vmem>>, vector<1x128xf32>
    %18 = vector.broadcast %17 : vector<1x128xf32> to vector<8x128xf32>
    %19 = arith.addf %16, %18 : vector<8x128xf32>
    %20 = tpu.iota {dimensions = array<i32: 0>} : vector<8x128xi32>
    %21 = tpu.iota {dimensions = array<i32: 1>} : vector<8x128xi32>
    %c2_i32 = arith.constant 2 : i32
    %22 = vector.broadcast %c2_i32 : i32 to vector<8x128xi32>
    %23 = arith.cmpi slt, %20, %22 : vector<8x128xi32>
    %c8_i32 = arith.constant 8 : i32
    %24 = vector.broadcast %c8_i32 : i32 to vector<8x128xi32>
    %25 = arith.cmpi slt, %21, %24 : vector<8x128xi32>
    %26 = arith.andi %23, %25 : vector<8x128xi1>
    %cst_17 = arith.constant 0.000000e+00 : f32
    %27 = vector.broadcast %cst_17 : f32 to vector<8x128xf32>
    %28 = arith.select %26, %19, %27 : vector<8x128xi1>, vector<8x128xf32>
    %29 = vector.shape_cast %28 : vector<8x128xf32> to vector<1x8x128xf32>
    %cst_18 = arith.constant dense<0.000000e+00> : vector<1xf32>
    %30 = vector.multi_reduction <add>, %29, %cst_18 [1, 2] : vector<1x8x128xf32> to vector<1xf32>
    %31 = vector.shape_cast %30 : vector<1xf32> to vector<1x1x1xf32>
    %32 = vector.extract %31[0, 0, 0] : f32 from vector<1x1x1xf32>
    %33 = vector.broadcast %32 : f32 to vector<1x1xf32>
    %cst_19 = arith.constant 6.250000e-02 : f32
    %34 = vector.broadcast %cst_19 : f32 to vector<1x1xf32>
    %35 = arith.mulf %33, %34 : vector<1x1xf32>
    %c8_i32_20 = arith.constant 8 : i32
    %36 = vector.broadcast %c8_i32_20 : i32 to vector<8x128xi32>
    %37 = arith.cmpi eq, %21, %36 : vector<8x128xi32>
    %cst_21 = arith.constant 0.000000e+00 : f32
    %38 = vector.broadcast %cst_21 : f32 to vector<8x128xf32>
    %39 = arith.select %37, %19, %38 : vector<8x128xi1>, vector<8x128xf32>
    %cst_22 = arith.constant dense<0.000000e+00> : vector<8xf32>
    %40 = vector.multi_reduction <add>, %39, %cst_22 [1] : vector<8x128xf32> to vector<8xf32>
    %41 = vector.shape_cast %40 : vector<8xf32> to vector<8x1xf32>
    %42 = vector.broadcast %41 : vector<8x1xf32> to vector<8x128xf32>
    %43 = arith.addf %19, %42 : vector<8x128xf32>
    %44 = vector.broadcast %35 : vector<1x1xf32> to vector<8x128xf32>
    %45 = arith.subf %43, %44 : vector<8x128xf32>
    %c0_23 = arith.constant 0 : index
    %c0_24 = arith.constant 0 : index
    %46 = vector.load %arg7[%c0_23, %c0_24] : memref<8x128xf32, #tpu.memory_space<vmem>>, vector<8x128xf32>
    tpu.vector_store %arg7[%c0_23, %c0_24], %45 {strides = array<i32>} : memref<8x128xf32, #tpu.memory_space<vmem>>, vector<8x128xf32>,
    return
  }
}

</mosaic_0001>

<llo_original>
// kernel: tpu_custom_call.1
$region0: #{tpu_custom_call.1}
  #allocation0 [shape = 'u32[]', space=smem, size = 0x4, offset = 0x4, fixed_abs, tag = 'smem constant byte address 0x4 - core index']
  #allocation1 [shape = 'u32[72,128]{1,0:T(1,128)}', space=vmem, size = 0x9000, scoped, tag = 'internal scratch']
  %s0 = inlined_call_operand.hbm [shape: f32[8,128], index: 0, kind: input, shape index: {}]
  %s1 = inlined_call_operand.hbm [shape: f32[128,128], index: 1, kind: input, shape index: {}]
  %s2 = inlined_call_operand.vmem [shape: f32[1,128], index: 2, kind: input, shape index: {}]
  %s3 = inlined_call_operand.hbm [shape: f32[128,128], index: 3, kind: input, shape index: {}]
  %s4 = inlined_call_operand.vmem [shape: f32[1,128], index: 4, kind: input, shape index: {}]
  %s5 = inlined_call_operand.hbm [shape: f32[128,128], index: 5, kind: input, shape index: {}]
  %s6 = inlined_call_operand.vmem [shape: f32[1,128], index: 6, kind: input, shape index: {}]
  %s7 = inlined_call_operand.hbm [shape: f32[8,128], index: 7, kind: output, shape index: {}]
  %s8 = sld [smem:[#allocation0]]
  $region54: #{tpu_custom_call.1} parent=0
    _
  %s10 = ssub.s32 1, %s8
  %s11 = scalar_select 0, %s10, %s8
  $region1: #{tpu_custom_call.1} parent=0
    #allocation2 [shape = 'u8[4096]{0}', space=vmem, size = 0x1000, scoped, tag = 'input window, operand 0, single buffered']
    #allocation3 [shape = 's32[1]{0}', space=sflag, size = 0x4, scoped, tag = 'scoped memory for tpu_custom_call.1']
    #allocation4 [shape = 's32[1]{0}', space=sflag, size = 0x4, scoped, tag = 'scoped memory for tpu_custom_call.1']
    #allocation5 [shape = 'u8[65536]{0}', space=vmem, size = 0x10000, scoped, tag = 'input window, operand 1, single buffered']
    #allocation6 [shape = 's32[1]{0}', space=sflag, size = 0x4, scoped, tag = 'scoped memory for tpu_custom_call.1']
    #allocation7 [shape = 'u8[65536]{0}', space=vmem, size = 0x10000, scoped, tag = 'input window, operand 3, single buffered']
    #allocation8 [shape = 'u8[65536]{0}', space=vmem, size = 0x10000, scoped, tag = 'input window, operand 5, single buffered']
    #allocation9 [shape = 's32[1]{0}', space=sflag, size = 0x4, scoped, tag = 'scoped memory for tpu_custom_call.1']
    #allocation10 [shape = 'u8[4096]{0}', space=vmem, size = 0x1000, scoped, tag = 'output window, operand 0, single buffered']
    %12 = vsyncpa [#allocation3], 0
    %13 = vsyncpa [#allocation6], 0
    %14 = vsyncpa [#allocation9], 0
    %15 = vsyncpa [#allocation4], 0
    // Predicated region
    $region2: #{tpu_custom_call.1} parent=1 // pred_check
      _
    $region3: #{tpu_custom_call.1} parent=1 // pred_check_branch
      %17 = sbr.rel (0) target = $region5
    $region4: #{tpu_custom_call.1} parent=1 // pred_region
      %19 = vsyncadd [#allocation3], 0
      %s21 = sshll.u32 %s0, 4
      %s22 = int_to_ptr.hbm [resolvable:$true] %s21
      %s23 = sshll.u32 [#allocation2], 4
      %s24 = int_to_ptr.vmem [resolvable:$true] %s23
      %26 = dma.hbm_to_vmem [thread:$0]  %s22, 128, %s24, [#allocation3]
    $region5: #{tpu_custom_call.1} parent=1 // pred_fallthru
      _
    // Predicated region
    $region6: #{tpu_custom_call.1} parent=1 // pred_check
      _
    $region7: #{tpu_custom_call.1} parent=1 // pred_check_branch
      %28 = sbr.rel (0) target = $region9
    $region8: #{tpu_custom_call.1} parent=1 // pred_region
      %30 = vsyncadd [#allocation6], 0
      %s31 = sshll.u32 %s1, 4
      %s32 = int_to_ptr.hbm [resolvable:$true] %s31
      %s33 = sshll.u32 [#allocation5], 4
      %s34 = int_to_ptr.vmem [resolvable:$true] %s33
      %39 = dma.hbm_to_vmem [thread:$0]  %s32, 2048, %s34, [#allocation6], 128, 128, 8
    $region9: #{tpu_custom_call.1} parent=1 // pred_fallthru
      _
    // Predicated region
    $region10: #{tpu_custom_call.1} parent=1 // pred_check
      _
    $region11: #{tpu_custom_call.1} parent=1 // pred_check_branch
      %41 = sbr.rel (0) target = $region13
    $region12: #{tpu_custom_call.1} parent=1 // pred_region
      _
    $region13: #{tpu_custom_call.1} parent=1 // pred_fallthru
      _
    // Predicated region
    $region14: #{tpu_custom_call.1} parent=1 // pred_check
      _
    $region15: #{tpu_custom_call.1} parent=1 // pred_check_branch
      %43 = sbr.rel (0) target = $region17
    $region16: #{tpu_custom_call.1} parent=1 // pred_region
      %45 = vsyncadd [#allocation6], 0
      %s46 = sshll.u32 %s3, 4
      %s47 = int_to_ptr.hbm [resolvable:$true] %s46
      %s48 = sshll.u32 [#allocation7], 4
      %s49 = int_to_ptr.vmem [resolvable:$true] %s48
      %54 = dma.hbm_to_vmem [thread:$0]  %s47, 2048, %s49, [#allocation6], 128, 128, 8
    $region17: #{tpu_custom_call.1} parent=1 // pred_fallthru
      _
    // Predicated region
    $region18: #{tpu_custom_call.1} parent=1 // pred_check
      _
    $region19: #{tpu_custom_call.1} parent=1 // pred_check_branch
      %56 = sbr.rel (0) target = $region21
    $region20: #{tpu_custom_call.1} parent=1 // pred_region
      _
    $region21: #{tpu_custom_call.1} parent=1 // pred_fallthru
      _
    // Predicated region
    $region22: #{tpu_custom_call.1} parent=1 // pred_check
      _
    $region23: #{tpu_custom_call.1} parent=1 // pred_check_branch
      %58 = sbr.rel (0) target = $region25
    $region24: #{tpu_custom_call.1} parent=1 // pred_region
      %60 = vsyncadd [#allocation9], 0
      %s61 = sshll.u32 %s5, 4
      %s62 = int_to_ptr.hbm [resolvable:$true] %s61
      %s63 = sshll.u32 [#allocation8], 4
      %s64 = int_to_ptr.vmem [resolvable:$true] %s63
      %69 = dma.hbm_to_vmem [thread:$0]  %s62, 2048, %s64, [#allocation9], 128, 128, 8
    $region25: #{tpu_custom_call.1} parent=1 // pred_fallthru
      _
    // Predicated region
    $region26: #{tpu_custom_call.1} parent=1 // pred_check
      _
    $region27: #{tpu_custom_call.1} parent=1 // pred_check_branch
      %71 = sbr.rel (0) target = $region29
    $region28: #{tpu_custom_call.1} parent=1 // pred_region
      _
    $region29: #{tpu_custom_call.1} parent=1 // pred_fallthru
      _
    // Predicated region
    $region30: #{tpu_custom_call.1} parent=1 // pred_check
      _
    $region31: #{tpu_custom_call.1} parent=1 // pred_check_branch
      %73 = sbr.rel (0) target = $region33
    $region32: #{tpu_custom_call.1} parent=1 // pred_region
      %75 = dma.done [#allocation3], 128
    $region33: #{tpu_custom_call.1} parent=1 // pred_fallthru
      _
    // Predicated region
    $region34: #{tpu_custom_call.1} parent=1 // pred_check
      _
    $region35: #{tpu_custom_call.1} parent=1 // pred_check_branch
      %77 = sbr.rel (0) target = $region37
    $region36: #{tpu_custom_call.1} parent=1 // pred_region
      %79 = dma.done [#allocation6], 2048
    $region37: #{tpu_custom_call.1} parent=1 // pred_fallthru
      _
    // Predicated region
    $region38: #{tpu_custom_call.1} parent=1 // pred_check
      _
    $region39: #{tpu_custom_call.1} parent=1 // pred_check_branch
      %81 = sbr.rel (0) target = $region41
    $region40: #{tpu_custom_call.1} parent=1 // pred_region
      %83 = dma.done [#allocation6], 2048
    $region41: #{tpu_custom_call.1} parent=1 // pred_fallthru
      _
    // Predicated region
    $region42: #{tpu_custom_call.1} parent=1 // pred_check
      _
    $region43: #{tpu_custom_call.1} parent=1 // pred_check_branch
      %85 = sbr.rel (0) target = $region45
    $region44: #{tpu_custom_call.1} parent=1 // pred_region
      %87 = dma.done [#allocation9], 2048
    $region45: #{tpu_custom_call.1} parent=1 // pred_fallthru
      _
    %v88 = vld [vmem:[#allocation2] sm:$0xff]
    %v89 = vld [vmem:[#allocation5] sm:$0xff]
    %v90 = vld [vmem:[#allocation5 + $0x8] sm:$0xff]
    %v91 = vld [vmem:[#allocation5 + $0x10] sm:$0xff]
    %v92 = vld [vmem:[#allocation5 + $0x18] sm:$0xff]
    %v93 = vld [vmem:[#allocation5 + $0x20] sm:$0xff]
    %v94 = vld [vmem:[#allocation5 + $0x28] sm:$0xff]
    %v95 = vld [vmem:[#allocation5 + $0x30] sm:$0xff]
    %v96 = vld [vmem:[#allocation5 + $0x38] sm:$0xff]
    %v97 = vld [vmem:[#allocation5 + $0x40] sm:$0xff]
    %v98 = vld [vmem:[#allocation5 + $0x48] sm:$0xff]
    %v99 = vld [vmem:[#allocation5 + $0x50] sm:$0xff]
    %v100 = vld [vmem:[#allocation5 + $0x58] sm:$0xff]
    %v101 = vld [vmem:[#allocation5 + $0x60] sm:$0xff]
    %v102 = vld [vmem:[#allocation5 + $0x68] sm:$0xff]
    %v103 = vld [vmem:[#allocation5 + $0x70] sm:$0xff]
    %v104 = vld [vmem:[#allocation5 + $0x78] sm:$0xff]
    %v105 = vld [vmem:[%s2] sm:$0x1]
    %v107 = vperm.slane %v105, 0
    %109 = vmatpush.msra.mxu0 %v104
    %110 = vmatpush.msra.mxu0 %v103
    %111 = vmatpush.msra.mxu0 %v102
    %112 = vmatpush.msra.mxu0 %v101
    %113 = vmatpush.msra.mxu0 %v100
    %114 = vmatpush.msra.mxu0 %v99
    %115 = vmatpush.msra.mxu0 %v98
    %116 = vmatpush.msra.mxu0 %v97
    %117 = vmatpush.msra.mxu0 %v96
    %118 = vmatpush.msra.mxu0 %v95
    %119 = vmatpush.msra.mxu0 %v94
    %120 = vmatpush.msra.mxu0 %v93
    %121 = vmatpush.msra.mxu0 %v92
    %122 = vmatpush.msra.mxu0 %v91
    %123 = vmatpush.msra.mxu0 %v90
    %124 = vmatpush.msra.mxu0 %v89
    %125 = vmatmul.f32.gmra.mxu0 %v88
    %v126 = vpop.f32.mrf.mxu0
    %v127 = vadd.f32 %v107, %v126
    %128 = vdwg.mxu0
    %v129 = vmax.f32 %v127, 0.0
    %v130 = vld [vmem:[#allocation7] sm:$0xff]
    %v131 = vld [vmem:[#allocation7 + $0x8] sm:$0xff]
    %v132 = vld [vmem:[#allocation7 + $0x10] sm:$0xff]
    %v133 = vld [vmem:[#allocation7 + $0x18] sm:$0xff]
    %v134 = vld [vmem:[#allocation7 + $0x20] sm:$0xff]
    %v135 = vld [vmem:[#allocation7 + $0x28] sm:$0xff]
    %v136 = vld [vmem:[#allocation7 + $0x30] sm:$0xff]
    %v137 = vld [vmem:[#allocation7 + $0x38] sm:$0xff]
    %v138 = vld [vmem:[#allocation7 + $0x40] sm:$0xff]
    %v139 = vld [vmem:[#allocation7 + $0x48] sm:$0xff]
    %v140 = vld [vmem:[#allocation7 + $0x50] sm:$0xff]
    %v141 = vld [vmem:[#allocation7 + $0x58] sm:$0xff]
    %v142 = vld [vmem:[#allocation7 + $0x60] sm:$0xff]
    %v143 = vld [vmem:[#allocation7 + $0x68] sm:$0xff]
    %v144 = vld [vmem:[#allocation7 + $0x70] sm:$0xff]
    %v145 = vld [vmem:[#allocation7 + $0x78] sm:$0xff]
    %v146 = vld [vmem:[%s4] sm:$0x1]
    %v148 = vperm.slane %v146, 0
    %150 = vmatpush.msra.mxu0 %v145
    %151 = vmatpush.msra.mxu0 %v144
    %152 = vmatpush.msra.mxu0 %v143
    %153 = vmatpush.msra.mxu0 %v142
    %154 = vmatpush.msra.mxu0 %v141
    %155 = vmatpush.msra.mxu0 %v140
    %156 = vmatpush.msra.mxu0 %v139
    %157 = vmatpush.msra.mxu0 %v138
    %158 = vmatpush.msra.mxu0 %v137
    %159 = vmatpush.msra.mxu0 %v136
    %160 = vmatpush.msra.mxu0 %v135
    %161 = vmatpush.msra.mxu0 %v134
    %162 = vmatpush.msra.mxu0 %v133
    %163 = vmatpush.msra.mxu0 %v132
    %164 = vmatpush.msra.mxu0 %v131
    %165 = vmatpush.msra.mxu0 %v130
    %166 = vmatmul.f32.gmra.mxu0 %v129
    %v167 = vpop.f32.mrf.mxu0
    %v168 = vadd.f32 %v148, %v167
    %169 = vdwg.mxu0
    %v170 = vmax.f32 %v168, 0.0
    %v171 = vld [vmem:[#allocation8] sm:$0xff]
    %v172 = vld [vmem:[#allocation8 + $0x8] sm:$0xff]
    %v173 = vld [vmem:[#allocation8 + $0x10] sm:$0xff]
    %v174 = vld [vmem:[#allocation8 + $0x18] sm:$0xff]
    %v175 = vld [vmem:[#allocation8 + $0x20] sm:$0xff]
    %v176 = vld [vmem:[#allocation8 + $0x28] sm:$0xff]
    %v177 = vld [vmem:[#allocation8 + $0x30] sm:$0xff]
    %v178 = vld [vmem:[#allocation8 + $0x38] sm:$0xff]
    %v179 = vld [vmem:[#allocation8 + $0x40] sm:$0xff]
    %v180 = vld [vmem:[#allocation8 + $0x48] sm:$0xff]
    %v181 = vld [vmem:[#allocation8 + $0x50] sm:$0xff]
    %v182 = vld [vmem:[#allocation8 + $0x58] sm:$0xff]
    %v183 = vld [vmem:[#allocation8 + $0x60] sm:$0xff]
    %v184 = vld [vmem:[#allocation8 + $0x68] sm:$0xff]
    %v185 = vld [vmem:[#allocation8 + $0x70] sm:$0xff]
    %v186 = vld [vmem:[#allocation8 + $0x78] sm:$0xff]
    %v187 = vld [vmem:[%s6] sm:$0x1]
    %v189 = vperm.slane %v187, 0
    %191 = vmatpush.msra.mxu0 %v186
    %192 = vmatpush.msra.mxu0 %v185
    %193 = vmatpush.msra.mxu0 %v184
    %194 = vmatpush.msra.mxu0 %v183
    %195 = vmatpush.msra.mxu0 %v182
    %196 = vmatpush.msra.mxu0 %v181
    %197 = vmatpush.msra.mxu0 %v180
    %198 = vmatpush.msra.mxu0 %v179
    %199 = vmatpush.msra.mxu0 %v178
    %200 = vmatpush.msra.mxu0 %v177
    %201 = vmatpush.msra.mxu0 %v176
    %202 = vmatpush.msra.mxu0 %v175
    %203 = vmatpush.msra.mxu0 %v174
    %204 = vmatpush.msra.mxu0 %v173
    %205 = vmatpush.msra.mxu0 %v172
    %206 = vmatpush.msra.mxu0 %v171
    %207 = vmatmul.f32.gmra.mxu0 %v170
    %v208 = vpop.f32.mrf.mxu0
    %v209 = vadd.f32 %v189, %v208
    %210 = vdwg.mxu0
    %v211 = vlaneseq
    %v212 = vshrl.u32 %v211, 7
    %v213 = vlaneseq
    %v214 = vand.u32 %v213, 127
    %vm215 = vcmp.lt.s32.totalorder %v212, 2
    %vm216 = vcmp.lt.s32.totalorder %v214, 8
    %vm217 = vmand %vm215, %vm216
    %v218 = vsel %vm217, %v209, 0.0
    %219 = vadd.xlane.f32.xlu0 %v218
    %v220 = vpop.xlane.xlu0 %219
    %v221 = vrot.slane %v220, 4
    %v222 = vadd.f32 %v220, %v221
    %v223 = vrot.slane %v222, 2
    %v224 = vadd.f32 %v222, %v223
    %v225 = vrot.slane %v224, 1
    %v226 = vadd.f32 %v224, %v225
    %s227 = vtos %v226
    %v228 = vstv %s227
    %v229 = vmul.f32 %v228, 0.0625
    %vm230 = vcmp.eq.s32.totalorder %v214, 8
    %v231 = vsel %vm230, %v209, 0.0
    %232 = vadd.xlane.f32.xlu0 %v231
    %v233 = vpop.xlane.xlu0 %232
    %v234 = vadd.f32 %v209, %v233
    %v235 = vsub.f32 %v234, %v229
    %236 = vst [vmem:[#allocation10] sm:$0xff] %v235
    // Predicated region
    $region46: #{tpu_custom_call.1} parent=1 // pred_check
      _
    $region47: #{tpu_custom_call.1} parent=1 // pred_check_branch
      %238 = sbr.rel (0) target = $region49
    $region48: #{tpu_custom_call.1} parent=1 // pred_region
      %240 = vsyncadd [#allocation4], 0
      %s242 = sshll.u32 [#allocation10], 4
      %s243 = int_to_ptr.vmem [resolvable:$true] %s242
      %s244 = sshll.u32 %s7, 4
      %s245 = int_to_ptr.hbm [resolvable:$true] %s244
      %247 = dma.vmem_to_hbm [thread:$0]  %s243, 128, %s245, [#allocation4]
    $region49: #{tpu_custom_call.1} parent=1 // pred_fallthru
      _
    // Predicated region
    $region50: #{tpu_custom_call.1} parent=1 // pred_check
      _
    $region51: #{tpu_custom_call.1} parent=1 // pred_check_branch
      %249 = sbr.rel (0) target = $region53
    $region52: #{tpu_custom_call.1} parent=1 // pred_region
      %251 = dma.done [#allocation4], 128
    $region53: #{tpu_custom_call.1} parent=1 // pred_fallthru
      _
    %252 = vsyncpa [#allocation3], 1
    %253 = vsyncpa [#allocation6], 1
    %254 = vsyncpa [#allocation9], 1
    %255 = vsyncpa [#allocation4], 1

</llo_original>
